<compile_context>
chip_gen: v7x
topology: tpu7x:2x2x1
jax: 0.10.0
libtpu: 0.0.40
codegen_flags: <defaults>
</compile_context>

<pallas_src>
import functools

import jax
import jax.numpy as jnp
from jax.experimental import pallas as pl
from jax.experimental.pallas import tpu as pltpu


def _rope_kernel(pos_ref, inv_ref, cos_ref, sin_ref, *, attention_scaling, out_dtype):
    # pos_ref: (T, 1) f32  -- positions as a sublane column (no relayout needed)
    # inv_ref: (1, H) f32  -- shared across every grid step
    # cos_ref / sin_ref: (T, 2*H) out_dtype
    pos = pos_ref[...]                      # (T, 1)
    inv = inv_ref[...]                      # (1, H)
    freqs = pos * inv                       # (T, H) broadcast outer product (VPU)

    # Transcendentals on the half-width tensor only; duplicate the result.
    c = jnp.cos(freqs)
    s = jnp.sin(freqs)
    if attention_scaling != 1.0:            # Python float baked in at trace time
        c = c * attention_scaling
        s = s * attention_scaling

    cos_ref[...] = jnp.concatenate([c, c], axis=-1).astype(out_dtype)
    sin_ref[...] = jnp.concatenate([s, s], axis=-1).astype(out_dtype)


def hf_llama_rotary_embedding(x, position_ids, inv_freq, attention_scaling=1.0,
                              row_tile=512):
    """Returns (cos, sin), each [B, S, dim], dtype == x.dtype.

    row_tile must be a multiple of 8 (sublane granularity); 512 is a good
    default that keeps per-step VMEM tiny on all of v5e/v6e/v7x while still
    amortizing the ~0.35 us per-step pipeline overhead.
    """
    B, S = position_ids.shape
    H = inv_freq.shape[0]
    dim = 2 * H
    out_dtype = x.dtype
    N = B * S

    # Fixed-size row tiles over flattened B*S rows.  If the whole problem fits
    # in one tile, use the full extent (satisfies the (8,128) block rule).
    T = N if N <= row_tile else row_tile
    grid = (pl.cdiv(N, T),)

    pos_col = position_ids.astype(jnp.float32).reshape(N, 1)   # column layout
    inv_row = inv_freq.astype(jnp.float32).reshape(1, H)

    kernel = functools.partial(
        _rope_kernel,
        attention_scaling=float(attention_scaling),
        out_dtype=out_dtype,
    )

    grid_spec = pltpu.PrefetchScalarGridSpec(
        num_scalar_prefetch=0,
        grid=grid,
        in_specs=[
            pl.BlockSpec((T, 1), lambda i: (i, 0)),   # position row-tile
            pl.BlockSpec((1, H), lambda i: (0, 0)),   # inv_freq (shared)
        ],
        out_specs=[
            pl.BlockSpec((T, dim), lambda i: (i, 0)),
            pl.BlockSpec((T, dim), lambda i: (i, 0)),
        ],
    )

    cos_flat, sin_flat = pl.pallas_call(
        kernel,
        out_shape=(
            jax.ShapeDtypeStruct((N, dim), out_dtype),
            jax.ShapeDtypeStruct((N, dim), out_dtype),
        ),
        grid_spec=grid_spec,
        compiler_params=pltpu.CompilerParams(
            dimension_semantics=("parallel",),   # free 2x on v7x (2 TCs)
            vmem_limit_bytes=64 << 20,
        ),
    )(pos_col, inv_row)

    return cos_flat.reshape(B, S, dim), sin_flat.reshape(B, S, dim)


def make_inv_freq(dim, base=10000.0):
    # inv_freq = 1 / base ** (arange(0, dim, 2) / dim)   -- shape [dim // 2]
    exponents = jnp.arange(0, dim, 2, dtype=jnp.float32) / float(dim)
    return 1.0 / (base ** exponents)


def _rope_reference(position_ids, inv_freq, attention_scaling, out_dtype):
    # Pure-JAX mirror of the PyTorch math.
    freqs = position_ids.astype(jnp.float32)[:, :, None] * inv_freq[None, None, :]
    emb = jnp.concatenate([freqs, freqs], axis=-1)
    cos = (jnp.cos(emb) * attention_scaling).astype(out_dtype)
    sin = (jnp.sin(emb) * attention_scaling).astype(out_dtype)
    return cos, sin


# TODO(synk): dynamic-rope-type inv_freq recomputation (_dynamic_frequency_update)
# is host-side buffer management in the PyTorch module and is not part of the
# default forward math implemented here.

if __name__ == "__main__":
    key = jax.random.PRNGKey(0)
    kx, kp = jax.random.split(key)

    # ---- Case 1: lane-dense production-like layout (dim = 128), scaling == 1 ----
    B, S, dim = 2, 16, 128
    base = 10000.0
    attention_scaling = 1.0

    x = jax.random.normal(kx, (B, S, dim), dtype=jnp.float32)  # only dtype is used
    offsets = jax.random.randint(kp, (B, 1), 0, 100, dtype=jnp.int32)
    position_ids = offsets + jnp.arange(S, dtype=jnp.int32)[None, :]
    inv_freq = make_inv_freq(dim, base)

    cos, sin = hf_llama_rotary_embedding(x, position_ids, inv_freq,
                                         attention_scaling=attention_scaling)
    cos = jax.block_until_ready(cos)
    sin = jax.block_until_ready(sin)

    cos_ref, sin_ref = _rope_reference(position_ids, inv_freq,
                                       attention_scaling, x.dtype)
    assert cos.shape == (B, S, dim) and sin.shape == (B, S, dim)
    assert cos.dtype == x.dtype and sin.dtype == x.dtype
    assert jnp.allclose(cos, cos_ref, atol=1e-6, rtol=1e-6)
    assert jnp.allclose(sin, sin_ref, atol=1e-6, rtol=1e-6)

    # ---- Case 2: ragged row count (partial last tile), scaling != 1.0 ----
    B2, S2, dim2 = 3, 5, 64
    scaling2 = 0.5
    x2 = jax.random.normal(kx, (B2, S2, dim2), dtype=jnp.float32)
    position_ids2 = jnp.tile(jnp.arange(S2, dtype=jnp.int32)[None, :], (B2, 1))
    inv_freq2 = make_inv_freq(dim2, base)

    cos2, sin2 = hf_llama_rotary_embedding(x2, position_ids2, inv_freq2,
                                           attention_scaling=scaling2,
                                           row_tile=8)   # forces grid=2, partial tile
    cos2 = jax.block_until_ready(cos2)
    sin2 = jax.block_until_ready(sin2)

    cos2_ref, sin2_ref = _rope_reference(position_ids2, inv_freq2, scaling2, x2.dtype)
    assert cos2.shape == (B2, S2, dim2) and sin2.shape == (B2, S2, dim2)
    assert jnp.allclose(cos2, cos2_ref, atol=1e-6, rtol=1e-6)
    assert jnp.allclose(sin2, sin2_ref, atol=1e-6, rtol=1e-6)

    print("KERNEL_OK")
</pallas_src>

<mosaic_0001>
module attributes {stable_mosaic.version = 11 : i64} {
  func.func @_rope_kernel(%arg0: i32, %arg1: memref<32x1xf32, #tpu.memory_space<vmem>>, %arg2: memref<1x64xf32, #tpu.memory_space<vmem>>, %arg3: memref<32x128xf32, #tpu.memory_space<vmem>>, %arg4: memref<32x128xf32, #tpu.memory_space<vmem>>) attributes {dimension_semantics = [#tpu.dimension_semantics<parallel>], iteration_bounds = array<i64: 1>, scalar_prefetch = 0 : i64, scratch_operands = 0 : i64, tpu.core_type = #tpu.core_type<tc>, window_params = [{transform_indices = @transform_0, window_bounds = array<i64: 32, 1>}, {pipeline_mode = #tpu.pipeline_mode<synchronous>, transform_indices = @transform_1, window_bounds = array<i64: 1, 64>}, {transform_indices = @transform_2, window_bounds = array<i64: 32, 128>}, {transform_indices = @transform_3, window_bounds = array<i64: 32, 128>}]} {
    %c0 = arith.constant 0 : index
    %c0_0 = arith.constant 0 : index
    %0 = vector.load %arg1[%c0, %c0_0] : memref<32x1xf32, #tpu.memory_space<vmem>>, vector<32x1xf32>
    %c0_1 = arith.constant 0 : index
    %c0_2 = arith.constant 0 : index
    %1 = vector.load %arg2[%c0_1, %c0_2] : memref<1x64xf32, #tpu.memory_space<vmem>>, vector<1x64xf32>
    %2 = vector.broadcast %0 : vector<32x1xf32> to vector<32x64xf32>
    %3 = vector.broadcast %1 : vector<1x64xf32> to vector<32x64xf32>
    %4 = arith.mulf %2, %3 : vector<32x64xf32>
    %5 = math.cos %4 : vector<32x64xf32>
    %6 = math.sin %4 : vector<32x64xf32>
    %7 = tpu.concatenate %5, %5 in 1 : vector<32x64xf32>, vector<32x64xf32> -> vector<32x128xf32>
    %c0_3 = arith.constant 0 : index
    %c0_4 = arith.constant 0 : index
    %8 = vector.load %arg3[%c0_3, %c0_4] : memref<32x128xf32, #tpu.memory_space<vmem>>, vector<32x128xf32>
    tpu.vector_store %arg3[%c0_3, %c0_4], %7 {strides = array<i32>} : memref<32x128xf32, #tpu.memory_space<vmem>>, vector<32x128xf32>,
    %9 = tpu.concatenate %6, %6 in 1 : vector<32x64xf32>, vector<32x64xf32> -> vector<32x128xf32>
    %c0_5 = arith.constant 0 : index
    %c0_6 = arith.constant 0 : index
    %10 = vector.load %arg4[%c0_5, %c0_6] : memref<32x128xf32, #tpu.memory_space<vmem>>, vector<32x128xf32>
    tpu.vector_store %arg4[%c0_5, %c0_6], %9 {strides = array<i32>} : memref<32x128xf32, #tpu.memory_space<vmem>>, vector<32x128xf32>,
    return
  }
  func.func @transform_0(%arg0: i32) -> (i32, i32) {
    %c0_i32 = arith.constant 0 : i32
    %c0_i32_0 = arith.constant 0 : i32
    return %arg0, %c0_i32 : i32, i32
  }
  func.func @transform_1(%arg0: i32) -> (i32, i32) {
    %c0_i32 = arith.constant 0 : i32
    %c0_i32_0 = arith.constant 0 : i32
    %c0_i32_1 = arith.constant 0 : i32
    return %c0_i32, %c0_i32_0 : i32, i32
  }
  func.func @transform_2(%arg0: i32) -> (i32, i32) {
    %c0_i32 = arith.constant 0 : i32
    %c0_i32_0 = arith.constant 0 : i32
    return %arg0, %c0_i32 : i32, i32
  }
  func.func @transform_3(%arg0: i32) -> (i32, i32) {
    %c0_i32 = arith.constant 0 : i32
    %c0_i32_0 = arith.constant 0 : i32
    return %arg0, %c0_i32 : i32, i32
  }
}

</mosaic_0001>

<llo_original>
// kernel: tpu_custom_call.1
$region0: #{tpu_custom_call.1}
  #allocation0 [shape = 'u32[]', space=smem, size = 0x4, offset = 0x4, fixed_abs, tag = 'smem constant byte address 0x4 - core index']
  #allocation1 [shape = 'u32[144,128]{1,0:T(1,128)}', space=vmem, size = 0x12000, scoped, tag = 'internal scratch']
  %s0 = inlined_call_operand.hbm [shape: f32[32,1], index: 0, kind: input, shape index: {}]
  %s1 = inlined_call_operand.hbm [shape: f32[1,64], index: 1, kind: input, shape index: {}]
  %s2 = inlined_call_operand.hbm [shape: f32[32,128], index: 2, kind: output, shape index: {0}]
  %s3 = inlined_call_operand.hbm [shape: f32[32,128], index: 3, kind: output, shape index: {1}]
  %4 = xla_tuple %s2, %s3
  %s5 = sld [smem:[#allocation0]]
  $region34: #{tpu_custom_call.1} parent=0
    _
  %s7 = ssub.s32 1, %s5
  %s8 = scalar_select 0, %s7, %s5
  $region1: #{tpu_custom_call.1} parent=0
    #allocation2 [shape = 'u8[16384]{0}', space=vmem, size = 0x4000, scoped, tag = 'input window, operand 0, single buffered']
    #allocation3 [shape = 's32[1]{0}', space=sflag, size = 0x4, scoped, tag = 'scoped memory for tpu_custom_call.1']
    #allocation4 [shape = 's32[1]{0}', space=sflag, size = 0x4, scoped, tag = 'scoped memory for tpu_custom_call.1']
    #allocation5 [shape = 'u8[512]{0}', space=vmem, size = 0x400, scoped, tag = 'input window, operand 1, single buffered']
    #allocation6 [shape = 's32[1]{0}', space=sflag, size = 0x4, scoped, tag = 'scoped memory for tpu_custom_call.1']
    #allocation7 [shape = 'u8[16384]{0}', space=vmem, size = 0x4000, scoped, tag = 'output window, operand 0, single buffered']
    #allocation8 [shape = 'u8[16384]{0}', space=vmem, size = 0x4000, scoped, tag = 'output window, operand 1, single buffered']
    #allocation9 [shape = 's32[1]{0}', space=sflag, size = 0x4, scoped, tag = 'scoped memory for tpu_custom_call.1']
    %9 = vsyncpa [#allocation3], 0
    %10 = vsyncpa [#allocation6], 0
    %11 = vsyncpa [#allocation4], 0
    %12 = vsyncpa [#allocation9], 0
    // Predicated region
    $region2: #{tpu_custom_call.1} parent=1 // pred_check
      _
    $region3: #{tpu_custom_call.1} parent=1 // pred_check_branch
      %14 = sbr.rel (0) target = $region5
    $region4: #{tpu_custom_call.1} parent=1 // pred_region
      %s16 = ssub.s32 512, 512
      %17 = vsyncadd [#allocation3], %s16
      %s18 = sshll.u32 [#allocation2], 4
      %s19 = int_to_ptr.vmem [resolvable:$true] %s18
      %24 = dma.hbm_to_vmem [thread:$0]  %s0, 512, %s19, [#allocation3], 128, 128, 8
    $region5: #{tpu_custom_call.1} parent=1 // pred_fallthru
      _
    // Predicated region
    $region6: #{tpu_custom_call.1} parent=1 // pred_check
      _
    $region7: #{tpu_custom_call.1} parent=1 // pred_check_branch
      %26 = sbr.rel (0) target = $region9
    $region8: #{tpu_custom_call.1} parent=1 // pred_region
      %s28 = ssub.s32 16, 16
      %29 = vsyncadd [#allocation6], %s28
      %s31 = sshll.u32 [#allocation5], 4
      %s32 = int_to_ptr.vmem [resolvable:$true] %s31
      %34 = dma.hbm_to_vmem [thread:$0]  %s1, 16, %s32, [#allocation6]
    $region9: #{tpu_custom_call.1} parent=1 // pred_fallthru
      _
    // Predicated region
    $region10: #{tpu_custom_call.1} parent=1 // pred_check
      _
    $region11: #{tpu_custom_call.1} parent=1 // pred_check_branch
      %36 = sbr.rel (0) target = $region13
    $region12: #{tpu_custom_call.1} parent=1 // pred_region
      %37 = dma.done [#allocation3], 512
    $region13: #{tpu_custom_call.1} parent=1 // pred_fallthru
      _
    // Predicated region
    $region14: #{tpu_custom_call.1} parent=1 // pred_check
      _
    $region15: #{tpu_custom_call.1} parent=1 // pred_check_branch
      %39 = sbr.rel (0) target = $region17
    $region16: #{tpu_custom_call.1} parent=1 // pred_region
      %40 = dma.done [#allocation6], 16
    $region17: #{tpu_custom_call.1} parent=1 // pred_fallthru
      _
    %v41 = vld [vmem:[#allocation2] sm:$0xff]
    %v42 = vld [vmem:[#allocation2 + $0x8] sm:$0xff]
    %v43 = vld [vmem:[#allocation2 + $0x10] sm:$0xff]
    %v44 = vld [vmem:[#allocation2 + $0x18] sm:$0xff]
    %v45 = vld [vmem:[#allocation5] sm:$0x1]
    %47 = vset.pattern.permute.xlu0 0
    %48 = vperm.xlu0 %47, %v41
    %v49 = vpop.permute.xlu0 %48
    %52 = vset.pattern.permute.xlu0 0
    %53 = vperm.xlu0 %52, %v42
    %v54 = vpop.permute.xlu0 %53
    %57 = vset.pattern.permute.xlu0 0
    %58 = vperm.xlu0 %57, %v43
    %v59 = vpop.permute.xlu0 %58
    %62 = vset.pattern.permute.xlu0 0
    %63 = vperm.xlu0 %62, %v44
    %v64 = vpop.permute.xlu0 %63
    %v67 = vlaneseq
    %v68 = vshrl.u32 %v67, 7
    %v69 = vsub.s32 0, %v68
    %v70 = vrot.slane %v45, %v69
    %v72 = vmul.f32 %v49, %v70
    %v73 = vmul.f32 %v54, %v70
    %v74 = vmul.f32 %v59, %v70
    %v75 = vmul.f32 %v64, %v70
    %v76 = vand.u32 2147483647, %v72
    %vm77 = vcmp.le.f32.partialorder %v76, 0.7853982
    %vm78 = vcmp.lt.s32.totalorder %v72, 0
    %v79 = vand.u32 %v72, 2139095040
    %v80 = vshrl.u32 %v79, 23
    %v81 = vsub.s32 %v80, 127
    %v82 = vand.u32 2147483647, %v72
    %v83 = vand.u32 %v82, 8388607
    %v84 = vor.u32 %v83, 8388608
    %v85 = vsub.s32 0, %v84
    %v86 = vadd.s32 %v81, 1
    %vm87 = vcmp.gt.s32.totalorder %v86, 0
    %v88 = vsel %vm87, %v86, 0
    %v89 = vshrl.u32 %v88, 5
    %v90 = vand.u32 %v88, 31
    %v91 = vsub.s32 32, %v90
    %v92 = vshrl.u32 683565275, %v91
    %v93 = vshll.u32 683565275, %v90
    %v94 = vshrl.u32 2475754826, %v91
    %v95 = vor.u32 %v93, %v94
    %v96 = vshll.u32 2475754826, %v90
    %v97 = vshrl.u32 2131351028, %v91
    %v98 = vor.u32 %v96, %v97
    %v99 = vshll.u32 2131351028, %v90
    %v100 = vshrl.u32 2102212464, %v91
    %v101 = vor.u32 %v99, %v100
    %v102 = vshll.u32 2102212464, %v90
    %v103 = vshrl.u32 920167782, %v91
    %v104 = vor.u32 %v102, %v103
    %v105 = vshll.u32 920167782, %v90
    %v106 = vshrl.u32 1326507024, %v91
    %v107 = vor.u32 %v105, %v106
    %vm108 = vcmp.lt.s32.totalorder %v89, 1
    %vm109 = vcmp.lt.s32.totalorder %v89, 2
    %vm110 = vcmp.lt.s32.totalorder %v89, 3
    %vm111 = vcmp.lt.s32.totalorder %v89, 4
    %v112 = vsel %vm108, %v92, %v95
    %v113 = vsel %vm111, %v101, 2102212464
    %v114 = vsel %vm110, %v98, %v113
    %v115 = vsel %vm109, %v112, %v114
    %v116 = vsel %vm108, %v95, %v98
    %v117 = vsel %vm111, %v104, 920167782
    %v118 = vsel %vm110, %v101, %v117
    %v119 = vsel %vm109, %v116, %v118
    %v120 = vsel %vm108, %v98, %v101
    %v121 = vsel %vm111, %v107, 1326507024
    %v122 = vsel %vm110, %v104, %v121
    %v123 = vsel %vm109, %v120, %v122
    %v124 = vshll.u32 %v84, 8
    %v125 = vmul.u32.u64.compose %v124, %v123
    %v126 = vextract.low.u32 %v125
    %v127 = vextract.high.u32 %v125
    %v128 = vmul.u32.u64.compose %v124, %v119
    %v129 = vextract.low.u32 %v128
    %v130 = vextract.high.u32 %v128
    %v131 = vmul.u32 %v124, %v115
    %v132 = vadd.s32 %v127, %v129
    %vm133 = vc.u32 %v127, %v129
    %v134 = vadd.s32 %v130, 1
    %v135 = vsel %vm133, %v134, %v130
    %v136 = vadd.s32 %v131, %v135
    %v137 = vadd.s32 %v136, 536870912
    %v138 = vshrl.u32 %v137, 30
    %v139 = vshll.u32 %v138, 30
    %v140 = vsub.s32 %v136, %v139
    %vm141 = vcmp.lt.s32.totalorder %v140, 0
    %v142 = vsub.s32 0, %v140
    %v143 = vsel %vm141, %v142, %v140
    %v144 = vclz %v143
    %v145 = vsub.s32 %v144, 2
    %vm146 = vcmp.gt.s32.totalorder 0, %v145
    %v147 = vsel %vm146, 0, %v145
    %v148 = vsub.s32 32, %v147
    %v149 = vshll.u32 %v140, %v147
    %v150 = vshrl.u32 %v132, %v148
    %v151 = vor.u32 %v149, %v150
    %v152 = vsub.s32 4294967266, %v147
    %v153 = vadd.s32 %v152, 127
    %v154 = vshll.u32 %v153, 23
    %v155 = vor.u32 4788187, %v154
    %v156 = vand.u32 2147483647, %v155
    %v158 = vcvt.s32.f32 %v151
    %v159 = vmul.f32 %v158, %v156
    %v160 = vxor.u32 %v159, 2147483648
    %v161 = vsel %vm78, %v160, %v159
    %v162 = vsub.s32 4, %v138
    %v163 = vsel %vm78, %v162, %v138
    %v164 = vsel %vm77, %v72, %v161
    %v165 = vsel %vm77, 0, %v163
    %v166 = vcosq.f32.pop %v164
    %v167 = vsinq.f32.pop %v164
    %vm168 = vweird.f32 %v72
    %v169 = vand.u32 %v165, 3
    %vm170 = vcmp.lt.s32.totalorder %v169, 2
    %vm171 = vcmp.eq.s32.totalorder %v169, 0
    %v172 = vxor.u32 %v167, 2147483648
    %v173 = vsel %vm171, %v166, %v172
    %vm174 = vcmp.eq.s32.totalorder %v169, 2
    %v175 = vxor.u32 %v166, 2147483648
    %v176 = vsel %vm174, %v175, %v167
    %v177 = vsel %vm170, %v173, %v176
    %v178 = vsel %vm168, nan, %v177
    %v179 = vand.u32 2147483647, %v73
    %vm180 = vcmp.le.f32.partialorder %v179, 0.7853982
    %vm181 = vcmp.lt.s32.totalorder %v73, 0
    %v182 = vand.u32 %v73, 2139095040
    %v183 = vshrl.u32 %v182, 23
    %v184 = vsub.s32 %v183, 127
    %v185 = vand.u32 2147483647, %v73
    %v186 = vand.u32 %v185, 8388607
    %v187 = vor.u32 %v186, 8388608
    %v188 = vsub.s32 0, %v187
    %v189 = vadd.s32 %v184, 1
    %vm190 = vcmp.gt.s32.totalorder %v189, 0
    %v191 = vsel %vm190, %v189, 0
    %v192 = vshrl.u32 %v191, 5
    %v193 = vand.u32 %v191, 31
    %v194 = vsub.s32 32, %v193
    %v195 = vshrl.u32 683565275, %v194
    %v196 = vshll.u32 683565275, %v193
    %v197 = vshrl.u32 2475754826, %v194
    %v198 = vor.u32 %v196, %v197
    %v199 = vshll.u32 2475754826, %v193
    %v200 = vshrl.u32 2131351028, %v194
    %v201 = vor.u32 %v199, %v200
    %v202 = vshll.u32 2131351028, %v193
    %v203 = vshrl.u32 2102212464, %v194
    %v204 = vor.u32 %v202, %v203
    %v205 = vshll.u32 2102212464, %v193
    %v206 = vshrl.u32 920167782, %v194
    %v207 = vor.u32 %v205, %v206
    %v208 = vshll.u32 920167782, %v193
    %v209 = vshrl.u32 1326507024, %v194
    %v210 = vor.u32 %v208, %v209
    %vm211 = vcmp.lt.s32.totalorder %v192, 1
    %vm212 = vcmp.lt.s32.totalorder %v192, 2
    %vm213 = vcmp.lt.s32.totalorder %v192, 3
    %vm214 = vcmp.lt.s32.totalorder %v192, 4
    %v215 = vsel %vm211, %v195, %v198
    %v216 = vsel %vm214, %v204, 2102212464
    %v217 = vsel %vm213, %v201, %v216
    %v218 = vsel %vm212, %v215, %v217
    %v219 = vsel %vm211, %v198, %v201
    %v220 = vsel %vm214, %v207, 920167782
    %v221 = vsel %vm213, %v204, %v220
    %v222 = vsel %vm212, %v219, %v221
    %v223 = vsel %vm211, %v201, %v204
    %v224 = vsel %vm214, %v210, 1326507024
    %v225 = vsel %vm213, %v207, %v224
    %v226 = vsel %vm212, %v223, %v225
    %v227 = vshll.u32 %v187, 8
    %v228 = vmul.u32.u64.compose %v227, %v226
    %v229 = vextract.low.u32 %v228
    %v230 = vextract.high.u32 %v228
    %v231 = vmul.u32.u64.compose %v227, %v222
    %v232 = vextract.low.u32 %v231
    %v233 = vextract.high.u32 %v231
    %v234 = vmul.u32 %v227, %v218
    %v235 = vadd.s32 %v230, %v232
    %vm236 = vc.u32 %v230, %v232
    %v237 = vadd.s32 %v233, 1
    %v238 = vsel %vm236, %v237, %v233
    %v239 = vadd.s32 %v234, %v238
    %v240 = vadd.s32 %v239, 536870912
    %v241 = vshrl.u32 %v240, 30
    %v242 = vshll.u32 %v241, 30
    %v243 = vsub.s32 %v239, %v242
    %vm244 = vcmp.lt.s32.totalorder %v243, 0
    %v245 = vsub.s32 0, %v243
    %v246 = vsel %vm244, %v245, %v243
    %v247 = vclz %v246
    %v248 = vsub.s32 %v247, 2
    %vm249 = vcmp.gt.s32.totalorder 0, %v248
    %v250 = vsel %vm249, 0, %v248
    %v251 = vsub.s32 32, %v250
    %v252 = vshll.u32 %v243, %v250
    %v253 = vshrl.u32 %v235, %v251
    %v254 = vor.u32 %v252, %v253
    %v255 = vsub.s32 4294967266, %v250
    %v256 = vadd.s32 %v255, 127
    %v257 = vshll.u32 %v256, 23
    %v258 = vor.u32 4788187, %v257
    %v259 = vand.u32 2147483647, %v258
    %v261 = vcvt.s32.f32 %v254
    %v262 = vmul.f32 %v261, %v259
    %v263 = vxor.u32 %v262, 2147483648
    %v264 = vsel %vm181, %v263, %v262
    %v265 = vsub.s32 4, %v241
    %v266 = vsel %vm181, %v265, %v241
    %v267 = vsel %vm180, %v73, %v264
    %v268 = vsel %vm180, 0, %v266
    %v269 = vcosq.f32.pop %v267
    %v270 = vsinq.f32.pop %v267
    %vm271 = vweird.f32 %v73
    %v272 = vand.u32 %v268, 3
    %vm273 = vcmp.lt.s32.totalorder %v272, 2
    %vm274 = vcmp.eq.s32.totalorder %v272, 0
    %v275 = vxor.u32 %v270, 2147483648
    %v276 = vsel %vm274, %v269, %v275
    %vm277 = vcmp.eq.s32.totalorder %v272, 2
    %v278 = vxor.u32 %v269, 2147483648
    %v279 = vsel %vm277, %v278, %v270
    %v280 = vsel %vm273, %v276, %v279
    %v281 = vsel %vm271, nan, %v280
    %v282 = vand.u32 2147483647, %v74
    %vm283 = vcmp.le.f32.partialorder %v282, 0.7853982
    %vm284 = vcmp.lt.s32.totalorder %v74, 0
    %v285 = vand.u32 %v74, 2139095040
    %v286 = vshrl.u32 %v285, 23
    %v287 = vsub.s32 %v286, 127
    %v288 = vand.u32 2147483647, %v74
    %v289 = vand.u32 %v288, 8388607
    %v290 = vor.u32 %v289, 8388608
    %v291 = vsub.s32 0, %v290
    %v292 = vadd.s32 %v287, 1
    %vm293 = vcmp.gt.s32.totalorder %v292, 0
    %v294 = vsel %vm293, %v292, 0
    %v295 = vshrl.u32 %v294, 5
    %v296 = vand.u32 %v294, 31
    %v297 = vsub.s32 32, %v296
    %v298 = vshrl.u32 683565275, %v297
    %v299 = vshll.u32 683565275, %v296
    %v300 = vshrl.u32 2475754826, %v297
    %v301 = vor.u32 %v299, %v300
    %v302 = vshll.u32 2475754826, %v296
    %v303 = vshrl.u32 2131351028, %v297
    %v304 = vor.u32 %v302, %v303
    %v305 = vshll.u32 2131351028, %v296
    %v306 = vshrl.u32 2102212464, %v297
    %v307 = vor.u32 %v305, %v306
    %v308 = vshll.u32 2102212464, %v296
    %v309 = vshrl.u32 920167782, %v297
    %v310 = vor.u32 %v308, %v309
    %v311 = vshll.u32 920167782, %v296
    %v312 = vshrl.u32 1326507024, %v297
    %v313 = vor.u32 %v311, %v312
    %vm314 = vcmp.lt.s32.totalorder %v295, 1
    %vm315 = vcmp.lt.s32.totalorder %v295, 2
    %vm316 = vcmp.lt.s32.totalorder %v295, 3
    %vm317 = vcmp.lt.s32.totalorder %v295, 4
    %v318 = vsel %vm314, %v298, %v301
    %v319 = vsel %vm317, %v307, 2102212464
    %v320 = vsel %vm316, %v304, %v319
    %v321 = vsel %vm315, %v318, %v320
    %v322 = vsel %vm314, %v301, %v304
    %v323 = vsel %vm317, %v310, 920167782
    %v324 = vsel %vm316, %v307, %v323
    %v325 = vsel %vm315, %v322, %v324
    %v326 = vsel %vm314, %v304, %v307
    %v327 = vsel %vm317, %v313, 1326507024
    %v328 = vsel %vm316, %v310, %v327
    %v329 = vsel %vm315, %v326, %v328
    %v330 = vshll.u32 %v290, 8
    %v331 = vmul.u32.u64.compose %v330, %v329
    %v332 = vextract.low.u32 %v331
    %v333 = vextract.high.u32 %v331
    %v334 = vmul.u32.u64.compose %v330, %v325
    %v335 = vextract.low.u32 %v334
    %v336 = vextract.high.u32 %v334
    %v337 = vmul.u32 %v330, %v321
    %v338 = vadd.s32 %v333, %v335
    %vm339 = vc.u32 %v333, %v335
    %v340 = vadd.s32 %v336, 1
    %v341 = vsel %vm339, %v340, %v336
    %v342 = vadd.s32 %v337, %v341
    %v343 = vadd.s32 %v342, 536870912
    %v344 = vshrl.u32 %v343, 30
    %v345 = vshll.u32 %v344, 30
    %v346 = vsub.s32 %v342, %v345
    %vm347 = vcmp.lt.s32.totalorder %v346, 0
    %v348 = vsub.s32 0, %v346
    %v349 = vsel %vm347, %v348, %v346
    %v350 = vclz %v349
    %v351 = vsub.s32 %v350, 2
    %vm352 = vcmp.gt.s32.totalorder 0, %v351
    %v353 = vsel %vm352, 0, %v351
    %v354 = vsub.s32 32, %v353
    %v355 = vshll.u32 %v346, %v353
    %v356 = vshrl.u32 %v338, %v354
    %v357 = vor.u32 %v355, %v356
    %v358 = vsub.s32 4294967266, %v353
    %v359 = vadd.s32 %v358, 127
    %v360 = vshll.u32 %v359, 23
    %v361 = vor.u32 4788187, %v360
    %v362 = vand.u32 2147483647, %v361
    %v364 = vcvt.s32.f32 %v357
    %v365 = vmul.f32 %v364, %v362
    %v366 = vxor.u32 %v365, 2147483648
    %v367 = vsel %vm284, %v366, %v365
    %v368 = vsub.s32 4, %v344
    %v369 = vsel %vm284, %v368, %v344
    %v370 = vsel %vm283, %v74, %v367
    %v371 = vsel %vm283, 0, %v369
    %v372 = vcosq.f32.pop %v370
    %v373 = vsinq.f32.pop %v370
    %vm374 = vweird.f32 %v74
    %v375 = vand.u32 %v371, 3
    %vm376 = vcmp.lt.s32.totalorder %v375, 2
    %vm377 = vcmp.eq.s32.totalorder %v375, 0
    %v378 = vxor.u32 %v373, 2147483648
    %v379 = vsel %vm377, %v372, %v378
    %vm380 = vcmp.eq.s32.totalorder %v375, 2
    %v381 = vxor.u32 %v372, 2147483648
    %v382 = vsel %vm380, %v381, %v373
    %v383 = vsel %vm376, %v379, %v382
    %v384 = vsel %vm374, nan, %v383
    %v385 = vand.u32 2147483647, %v75
    %vm386 = vcmp.le.f32.partialorder %v385, 0.7853982
    %vm387 = vcmp.lt.s32.totalorder %v75, 0
    %v388 = vand.u32 %v75, 2139095040
    %v389 = vshrl.u32 %v388, 23
    %v390 = vsub.s32 %v389, 127
    %v391 = vand.u32 2147483647, %v75
    %v392 = vand.u32 %v391, 8388607
    %v393 = vor.u32 %v392, 8388608
    %v394 = vsub.s32 0, %v393
    %v395 = vadd.s32 %v390, 1
    %vm396 = vcmp.gt.s32.totalorder %v395, 0
    %v397 = vsel %vm396, %v395, 0
    %v398 = vshrl.u32 %v397, 5
    %v399 = vand.u32 %v397, 31
    %v400 = vsub.s32 32, %v399
    %v401 = vshrl.u32 683565275, %v400
    %v402 = vshll.u32 683565275, %v399
    %v403 = vshrl.u32 2475754826, %v400
    %v404 = vor.u32 %v402, %v403
    %v405 = vshll.u32 2475754826, %v399
    %v406 = vshrl.u32 2131351028, %v400
    %v407 = vor.u32 %v405, %v406
    %v408 = vshll.u32 2131351028, %v399
    %v409 = vshrl.u32 2102212464, %v400
    %v410 = vor.u32 %v408, %v409
    %v411 = vshll.u32 2102212464, %v399
    %v412 = vshrl.u32 920167782, %v400
    %v413 = vor.u32 %v411, %v412
    %v414 = vshll.u32 920167782, %v399
    %v415 = vshrl.u32 1326507024, %v400
    %v416 = vor.u32 %v414, %v415
    %vm417 = vcmp.lt.s32.totalorder %v398, 1
    %vm418 = vcmp.lt.s32.totalorder %v398, 2
    %vm419 = vcmp.lt.s32.totalorder %v398, 3
    %vm420 = vcmp.lt.s32.totalorder %v398, 4
    %v421 = vsel %vm417, %v401, %v404
    %v422 = vsel %vm420, %v410, 2102212464
    %v423 = vsel %vm419, %v407, %v422
    %v424 = vsel %vm418, %v421, %v423
    %v425 = vsel %vm417, %v404, %v407
    %v426 = vsel %vm420, %v413, 920167782
    %v427 = vsel %vm419, %v410, %v426
    %v428 = vsel %vm418, %v425, %v427
    %v429 = vsel %vm417, %v407, %v410
    %v430 = vsel %vm420, %v416, 1326507024
    %v431 = vsel %vm419, %v413, %v430
    %v432 = vsel %vm418, %v429, %v431
    %v433 = vshll.u32 %v393, 8
    %v434 = vmul.u32.u64.compose %v433, %v432
    %v435 = vextract.low.u32 %v434
    %v436 = vextract.high.u32 %v434
    %v437 = vmul.u32.u64.compose %v433, %v428
    %v438 = vextract.low.u32 %v437
    %v439 = vextract.high.u32 %v437
    %v440 = vmul.u32 %v433, %v424
    %v441 = vadd.s32 %v436, %v438
    %vm442 = vc.u32 %v436, %v438
    %v443 = vadd.s32 %v439, 1
    %v444 = vsel %vm442, %v443, %v439
    %v445 = vadd.s32 %v440, %v444
    %v446 = vadd.s32 %v445, 536870912
    %v447 = vshrl.u32 %v446, 30
    %v448 = vshll.u32 %v447, 30
    %v449 = vsub.s32 %v445, %v448
    %vm450 = vcmp.lt.s32.totalorder %v449, 0
    %v451 = vsub.s32 0, %v449
    %v452 = vsel %vm450, %v451, %v449
    %v453 = vclz %v452
    %v454 = vsub.s32 %v453, 2
    %vm455 = vcmp.gt.s32.totalorder 0, %v454
    %v456 = vsel %vm455, 0, %v454
    %v457 = vsub.s32 32, %v456
    %v458 = vshll.u32 %v449, %v456
    %v459 = vshrl.u32 %v441, %v457
    %v460 = vor.u32 %v458, %v459
    %v461 = vsub.s32 4294967266, %v456
    %v462 = vadd.s32 %v461, 127
    %v463 = vshll.u32 %v462, 23
    %v464 = vor.u32 4788187, %v463
    %v465 = vand.u32 2147483647, %v464
    %v467 = vcvt.s32.f32 %v460
    %v468 = vmul.f32 %v467, %v465
    %v469 = vxor.u32 %v468, 2147483648
    %v470 = vsel %vm387, %v469, %v468
    %v471 = vsub.s32 4, %v447
    %v472 = vsel %vm387, %v471, %v447
    %v473 = vsel %vm386, %v75, %v470
    %v474 = vsel %vm386, 0, %v472
    %v475 = vcosq.f32.pop %v473
    %v476 = vsinq.f32.pop %v473
    %vm477 = vweird.f32 %v75
    %v478 = vand.u32 %v474, 3
    %vm479 = vcmp.lt.s32.totalorder %v478, 2
    %vm480 = vcmp.eq.s32.totalorder %v478, 0
    %v481 = vxor.u32 %v476, 2147483648
    %v482 = vsel %vm480, %v475, %v481
    %vm483 = vcmp.eq.s32.totalorder %v478, 2
    %v484 = vxor.u32 %v475, 2147483648
    %v485 = vsel %vm483, %v484, %v476
    %v486 = vsel %vm479, %v482, %v485
    %v487 = vsel %vm477, nan, %v486
    %v488 = vand.u32 2147483647, %v72
    %vm489 = vcmp.le.f32.partialorder %v488, 0.7853982
    %vm490 = vcmp.lt.s32.totalorder %v72, 0
    %v491 = vand.u32 %v72, 2139095040
    %v492 = vshrl.u32 %v491, 23
    %v493 = vsub.s32 %v492, 127
    %v494 = vand.u32 2147483647, %v72
    %v495 = vand.u32 %v494, 8388607
    %v496 = vor.u32 %v495, 8388608
    %v497 = vsub.s32 0, %v496
    %v498 = vadd.s32 %v493, 1
    %vm499 = vcmp.gt.s32.totalorder %v498, 0
    %v500 = vsel %vm499, %v498, 0
    %v501 = vshrl.u32 %v500, 5
    %v502 = vand.u32 %v500, 31
    %v503 = vsub.s32 32, %v502
    %v504 = vshrl.u32 683565275, %v503
    %v505 = vshll.u32 683565275, %v502
    %v506 = vshrl.u32 2475754826, %v503
    %v507 = vor.u32 %v505, %v506
    %v508 = vshll.u32 2475754826, %v502
    %v509 = vshrl.u32 2131351028, %v503
    %v510 = vor.u32 %v508, %v509
    %v511 = vshll.u32 2131351028, %v502
    %v512 = vshrl.u32 2102212464, %v503
    %v513 = vor.u32 %v511, %v512
    %v514 = vshll.u32 2102212464, %v502
    %v515 = vshrl.u32 920167782, %v503
    %v516 = vor.u32 %v514, %v515
    %v517 = vshll.u32 920167782, %v502
    %v518 = vshrl.u32 1326507024, %v503
    %v519 = vor.u32 %v517, %v518
    %vm520 = vcmp.lt.s32.totalorder %v501, 1
    %vm521 = vcmp.lt.s32.totalorder %v501, 2
    %vm522 = vcmp.lt.s32.totalorder %v501, 3
    %vm523 = vcmp.lt.s32.totalorder %v501, 4
    %v524 = vsel %vm520, %v504, %v507
    %v525 = vsel %vm523, %v513, 2102212464
    %v526 = vsel %vm522, %v510, %v525
    %v527 = vsel %vm521, %v524, %v526
    %v528 = vsel %vm520, %v507, %v510
    %v529 = vsel %vm523, %v516, 920167782
    %v530 = vsel %vm522, %v513, %v529
    %v531 = vsel %vm521, %v528, %v530
    %v532 = vsel %vm520, %v510, %v513
    %v533 = vsel %vm523, %v519, 1326507024
    %v534 = vsel %vm522, %v516, %v533
    %v535 = vsel %vm521, %v532, %v534
    %v536 = vshll.u32 %v496, 8
    %v537 = vmul.u32.u64.compose %v536, %v535
    %v538 = vextract.low.u32 %v537
    %v539 = vextract.high.u32 %v537
    %v540 = vmul.u32.u64.compose %v536, %v531
    %v541 = vextract.low.u32 %v540
    %v542 = vextract.high.u32 %v540
    %v543 = vmul.u32 %v536, %v527
    %v544 = vadd.s32 %v539, %v541
    %vm545 = vc.u32 %v539, %v541
    %v546 = vadd.s32 %v542, 1
    %v547 = vsel %vm545, %v546, %v542
    %v548 = vadd.s32 %v543, %v547
    %v549 = vadd.s32 %v548, 536870912
    %v550 = vshrl.u32 %v549, 30
    %v551 = vshll.u32 %v550, 30
    %v552 = vsub.s32 %v548, %v551
    %vm553 = vcmp.lt.s32.totalorder %v552, 0
    %v554 = vsub.s32 0, %v552
    %v555 = vsel %vm553, %v554, %v552
    %v556 = vclz %v555
    %v557 = vsub.s32 %v556, 2
    %vm558 = vcmp.gt.s32.totalorder 0, %v557
    %v559 = vsel %vm558, 0, %v557
    %v560 = vsub.s32 32, %v559
    %v561 = vshll.u32 %v552, %v559
    %v562 = vshrl.u32 %v544, %v560
    %v563 = vor.u32 %v561, %v562
    %v564 = vsub.s32 4294967266, %v559
    %v565 = vadd.s32 %v564, 127
    %v566 = vshll.u32 %v565, 23
    %v567 = vor.u32 4788187, %v566
    %v568 = vand.u32 2147483647, %v567
    %v570 = vcvt.s32.f32 %v563
    %v571 = vmul.f32 %v570, %v568
    %v572 = vxor.u32 %v571, 2147483648
    %v573 = vsel %vm490, %v572, %v571
    %v574 = vsub.s32 4, %v550
    %v575 = vsel %vm490, %v574, %v550
    %v576 = vsel %vm489, %v72, %v573
    %v577 = vsel %vm489, 0, %v575
    %v578 = vcosq.f32.pop %v576
    %v579 = vsinq.f32.pop %v576
    %vm580 = vweird.f32 %v72
    %v581 = vadd.s32 %v577, 3
    %v582 = vand.u32 %v581, 3
    %vm583 = vcmp.lt.s32.totalorder %v582, 2
    %vm584 = vcmp.eq.s32.totalorder %v582, 0
    %v585 = vxor.u32 %v579, 2147483648
    %v586 = vsel %vm584, %v578, %v585
    %vm587 = vcmp.eq.s32.totalorder %v582, 2
    %v588 = vxor.u32 %v578, 2147483648
    %v589 = vsel %vm587, %v588, %v579
    %v590 = vsel %vm583, %v586, %v589
    %v591 = vsel %vm580, nan, %v590
    %v592 = vand.u32 2147483647, %v73
    %vm593 = vcmp.le.f32.partialorder %v592, 0.7853982
    %vm594 = vcmp.lt.s32.totalorder %v73, 0
    %v595 = vand.u32 %v73, 2139095040
    %v596 = vshrl.u32 %v595, 23
    %v597 = vsub.s32 %v596, 127
    %v598 = vand.u32 2147483647, %v73
    %v599 = vand.u32 %v598, 8388607
    %v600 = vor.u32 %v599, 8388608
    %v601 = vsub.s32 0, %v600
    %v602 = vadd.s32 %v597, 1
    %vm603 = vcmp.gt.s32.totalorder %v602, 0
    %v604 = vsel %vm603, %v602, 0
    %v605 = vshrl.u32 %v604, 5
    %v606 = vand.u32 %v604, 31
    %v607 = vsub.s32 32, %v606
    %v608 = vshrl.u32 683565275, %v607
    %v609 = vshll.u32 683565275, %v606
    %v610 = vshrl.u32 2475754826, %v607
    %v611 = vor.u32 %v609, %v610
    %v612 = vshll.u32 2475754826, %v606
    %v613 = vshrl.u32 2131351028, %v607
    %v614 = vor.u32 %v612, %v613
    %v615 = vshll.u32 2131351028, %v606
    %v616 = vshrl.u32 2102212464, %v607
    %v617 = vor.u32 %v615, %v616
    %v618 = vshll.u32 2102212464, %v606
    %v619 = vshrl.u32 920167782, %v607
    %v620 = vor.u32 %v618, %v619
    %v621 = vshll.u32 920167782, %v606
    %v622 = vshrl.u32 1326507024, %v607
    %v623 = vor.u32 %v621, %v622
    %vm624 = vcmp.lt.s32.totalorder %v605, 1
    %vm625 = vcmp.lt.s32.totalorder %v605, 2
    %vm626 = vcmp.lt.s32.totalorder %v605, 3
    %vm627 = vcmp.lt.s32.totalorder %v605, 4
    %v628 = vsel %vm624, %v608, %v611
    %v629 = vsel %vm627, %v617, 2102212464
    %v630 = vsel %vm626, %v614, %v629
    %v631 = vsel %vm625, %v628, %v630
    %v632 = vsel %vm624, %v611, %v614
    %v633 = vsel %vm627, %v620, 920167782
    %v634 = vsel %vm626, %v617, %v633
    %v635 = vsel %vm625, %v632, %v634
    %v636 = vsel %vm624, %v614, %v617
    %v637 = vsel %vm627, %v623, 1326507024
    %v638 = vsel %vm626, %v620, %v637
    %v639 = vsel %vm625, %v636, %v638
    %v640 = vshll.u32 %v600, 8
    %v641 = vmul.u32.u64.compose %v640, %v639
    %v642 = vextract.low.u32 %v641
    %v643 = vextract.high.u32 %v641
    %v644 = vmul.u32.u64.compose %v640, %v635
    %v645 = vextract.low.u32 %v644
    %v646 = vextract.high.u32 %v644
    %v647 = vmul.u32 %v640, %v631
    %v648 = vadd.s32 %v643, %v645
    %vm649 = vc.u32 %v643, %v645
    %v650 = vadd.s32 %v646, 1
    %v651 = vsel %vm649, %v650, %v646
    %v652 = vadd.s32 %v647, %v651
    %v653 = vadd.s32 %v652, 536870912
    %v654 = vshrl.u32 %v653, 30
    %v655 = vshll.u32 %v654, 30
    %v656 = vsub.s32 %v652, %v655
    %vm657 = vcmp.lt.s32.totalorder %v656, 0
    %v658 = vsub.s32 0, %v656
    %v659 = vsel %vm657, %v658, %v656
    %v660 = vclz %v659
    %v661 = vsub.s32 %v660, 2
    %vm662 = vcmp.gt.s32.totalorder 0, %v661
    %v663 = vsel %vm662, 0, %v661
    %v664 = vsub.s32 32, %v663
    %v665 = vshll.u32 %v656, %v663
    %v666 = vshrl.u32 %v648, %v664
    %v667 = vor.u32 %v665, %v666
    %v668 = vsub.s32 4294967266, %v663
    %v669 = vadd.s32 %v668, 127
    %v670 = vshll.u32 %v669, 23
    %v671 = vor.u32 4788187, %v670
    %v672 = vand.u32 2147483647, %v671
    %v674 = vcvt.s32.f32 %v667
    %v675 = vmul.f32 %v674, %v672
    %v676 = vxor.u32 %v675, 2147483648
    %v677 = vsel %vm594, %v676, %v675
    %v678 = vsub.s32 4, %v654
    %v679 = vsel %vm594, %v678, %v654
    %v680 = vsel %vm593, %v73, %v677
    %v681 = vsel %vm593, 0, %v679
    %v682 = vcosq.f32.pop %v680
    %v683 = vsinq.f32.pop %v680
    %vm684 = vweird.f32 %v73
    %v685 = vadd.s32 %v681, 3
    %v686 = vand.u32 %v685, 3
    %vm687 = vcmp.lt.s32.totalorder %v686, 2
    %vm688 = vcmp.eq.s32.totalorder %v686, 0
    %v689 = vxor.u32 %v683, 2147483648
    %v690 = vsel %vm688, %v682, %v689
    %vm691 = vcmp.eq.s32.totalorder %v686, 2
    %v692 = vxor.u32 %v682, 2147483648
    %v693 = vsel %vm691, %v692, %v683
    %v694 = vsel %vm687, %v690, %v693
    %v695 = vsel %vm684, nan, %v694
    %v696 = vand.u32 2147483647, %v74
    %vm697 = vcmp.le.f32.partialorder %v696, 0.7853982
    %vm698 = vcmp.lt.s32.totalorder %v74, 0
    %v699 = vand.u32 %v74, 2139095040
    %v700 = vshrl.u32 %v699, 23
    %v701 = vsub.s32 %v700, 127
    %v702 = vand.u32 2147483647, %v74
    %v703 = vand.u32 %v702, 8388607
    %v704 = vor.u32 %v703, 8388608
    %v705 = vsub.s32 0, %v704
    %v706 = vadd.s32 %v701, 1
    %vm707 = vcmp.gt.s32.totalorder %v706, 0
    %v708 = vsel %vm707, %v706, 0
    %v709 = vshrl.u32 %v708, 5
    %v710 = vand.u32 %v708, 31
    %v711 = vsub.s32 32, %v710
    %v712 = vshrl.u32 683565275, %v711
    %v713 = vshll.u32 683565275, %v710
    %v714 = vshrl.u32 2475754826, %v711
    %v715 = vor.u32 %v713, %v714
    %v716 = vshll.u32 2475754826, %v710
    %v717 = vshrl.u32 2131351028, %v711
    %v718 = vor.u32 %v716, %v717
    %v719 = vshll.u32 2131351028, %v710
    %v720 = vshrl.u32 2102212464, %v711
    %v721 = vor.u32 %v719, %v720
    %v722 = vshll.u32 2102212464, %v710
    %v723 = vshrl.u32 920167782, %v711
    %v724 = vor.u32 %v722, %v723
    %v725 = vshll.u32 920167782, %v710
    %v726 = vshrl.u32 1326507024, %v711
    %v727 = vor.u32 %v725, %v726
    %vm728 = vcmp.lt.s32.totalorder %v709, 1
    %vm729 = vcmp.lt.s32.totalorder %v709, 2
    %vm730 = vcmp.lt.s32.totalorder %v709, 3
    %vm731 = vcmp.lt.s32.totalorder %v709, 4
    %v732 = vsel %vm728, %v712, %v715
    %v733 = vsel %vm731, %v721, 2102212464
    %v734 = vsel %vm730, %v718, %v733
    %v735 = vsel %vm729, %v732, %v734
    %v736 = vsel %vm728, %v715, %v718
    %v737 = vsel %vm731, %v724, 920167782
    %v738 = vsel %vm730, %v721, %v737
    %v739 = vsel %vm729, %v736, %v738
    %v740 = vsel %vm728, %v718, %v721
    %v741 = vsel %vm731, %v727, 1326507024
    %v742 = vsel %vm730, %v724, %v741
    %v743 = vsel %vm729, %v740, %v742
    %v744 = vshll.u32 %v704, 8
    %v745 = vmul.u32.u64.compose %v744, %v743
    %v746 = vextract.low.u32 %v745
    %v747 = vextract.high.u32 %v745
    %v748 = vmul.u32.u64.compose %v744, %v739
    %v749 = vextract.low.u32 %v748
    %v750 = vextract.high.u32 %v748
    %v751 = vmul.u32 %v744, %v735
    %v752 = vadd.s32 %v747, %v749
    %vm753 = vc.u32 %v747, %v749
    %v754 = vadd.s32 %v750, 1
    %v755 = vsel %vm753, %v754, %v750
    %v756 = vadd.s32 %v751, %v755
    %v757 = vadd.s32 %v756, 536870912
    %v758 = vshrl.u32 %v757, 30
    %v759 = vshll.u32 %v758, 30
    %v760 = vsub.s32 %v756, %v759
    %vm761 = vcmp.lt.s32.totalorder %v760, 0
    %v762 = vsub.s32 0, %v760
    %v763 = vsel %vm761, %v762, %v760
    %v764 = vclz %v763
    %v765 = vsub.s32 %v764, 2
    %vm766 = vcmp.gt.s32.totalorder 0, %v765
    %v767 = vsel %vm766, 0, %v765
    %v768 = vsub.s32 32, %v767
    %v769 = vshll.u32 %v760, %v767
    %v770 = vshrl.u32 %v752, %v768
    %v771 = vor.u32 %v769, %v770
    %v772 = vsub.s32 4294967266, %v767
    %v773 = vadd.s32 %v772, 127
    %v774 = vshll.u32 %v773, 23
    %v775 = vor.u32 4788187, %v774
    %v776 = vand.u32 2147483647, %v775
    %v778 = vcvt.s32.f32 %v771
    %v779 = vmul.f32 %v778, %v776
    %v780 = vxor.u32 %v779, 2147483648
    %v781 = vsel %vm698, %v780, %v779
    %v782 = vsub.s32 4, %v758
    %v783 = vsel %vm698, %v782, %v758
    %v784 = vsel %vm697, %v74, %v781
    %v785 = vsel %vm697, 0, %v783
    %v786 = vcosq.f32.pop %v784
    %v787 = vsinq.f32.pop %v784
    %vm788 = vweird.f32 %v74
    %v789 = vadd.s32 %v785, 3
    %v790 = vand.u32 %v789, 3
    %vm791 = vcmp.lt.s32.totalorder %v790, 2
    %vm792 = vcmp.eq.s32.totalorder %v790, 0
    %v793 = vxor.u32 %v787, 2147483648
    %v794 = vsel %vm792, %v786, %v793
    %vm795 = vcmp.eq.s32.totalorder %v790, 2
    %v796 = vxor.u32 %v786, 2147483648
    %v797 = vsel %vm795, %v796, %v787
    %v798 = vsel %vm791, %v794, %v797
    %v799 = vsel %vm788, nan, %v798
    %v800 = vand.u32 2147483647, %v75
    %vm801 = vcmp.le.f32.partialorder %v800, 0.7853982
    %vm802 = vcmp.lt.s32.totalorder %v75, 0
    %v803 = vand.u32 %v75, 2139095040
    %v804 = vshrl.u32 %v803, 23
    %v805 = vsub.s32 %v804, 127
    %v806 = vand.u32 2147483647, %v75
    %v807 = vand.u32 %v806, 8388607
    %v808 = vor.u32 %v807, 8388608
    %v809 = vsub.s32 0, %v808
    %v810 = vadd.s32 %v805, 1
    %vm811 = vcmp.gt.s32.totalorder %v810, 0
    %v812 = vsel %vm811, %v810, 0
    %v813 = vshrl.u32 %v812, 5
    %v814 = vand.u32 %v812, 31
    %v815 = vsub.s32 32, %v814
    %v816 = vshrl.u32 683565275, %v815
    %v817 = vshll.u32 683565275, %v814
    %v818 = vshrl.u32 2475754826, %v815
    %v819 = vor.u32 %v817, %v818
    %v820 = vshll.u32 2475754826, %v814
    %v821 = vshrl.u32 2131351028, %v815
    %v822 = vor.u32 %v820, %v821
    %v823 = vshll.u32 2131351028, %v814
    %v824 = vshrl.u32 2102212464, %v815
    %v825 = vor.u32 %v823, %v824
    %v826 = vshll.u32 2102212464, %v814
    %v827 = vshrl.u32 920167782, %v815
    %v828 = vor.u32 %v826, %v827
    %v829 = vshll.u32 920167782, %v814
    %v830 = vshrl.u32 1326507024, %v815
    %v831 = vor.u32 %v829, %v830
    %vm832 = vcmp.lt.s32.totalorder %v813, 1
    %vm833 = vcmp.lt.s32.totalorder %v813, 2
    %vm834 = vcmp.lt.s32.totalorder %v813, 3
    %vm835 = vcmp.lt.s32.totalorder %v813, 4
    %v836 = vsel %vm832, %v816, %v819
    %v837 = vsel %vm835, %v825, 2102212464
    %v838 = vsel %vm834, %v822, %v837
    %v839 = vsel %vm833, %v836, %v838
    %v840 = vsel %vm832, %v819, %v822
    %v841 = vsel %vm835, %v828, 920167782
    %v842 = vsel %vm834, %v825, %v841
    %v843 = vsel %vm833, %v840, %v842
    %v844 = vsel %vm832, %v822, %v825
    %v845 = vsel %vm835, %v831, 1326507024
    %v846 = vsel %vm834, %v828, %v845
    %v847 = vsel %vm833, %v844, %v846
    %v848 = vshll.u32 %v808, 8
    %v849 = vmul.u32.u64.compose %v848, %v847
    %v850 = vextract.low.u32 %v849
    %v851 = vextract.high.u32 %v849
    %v852 = vmul.u32.u64.compose %v848, %v843
    %v853 = vextract.low.u32 %v852
    %v854 = vextract.high.u32 %v852
    %v855 = vmul.u32 %v848, %v839
    %v856 = vadd.s32 %v851, %v853
    %vm857 = vc.u32 %v851, %v853
    %v858 = vadd.s32 %v854, 1
    %v859 = vsel %vm857, %v858, %v854
    %v860 = vadd.s32 %v855, %v859
    %v861 = vadd.s32 %v860, 536870912
    %v862 = vshrl.u32 %v861, 30
    %v863 = vshll.u32 %v862, 30
    %v864 = vsub.s32 %v860, %v863
    %vm865 = vcmp.lt.s32.totalorder %v864, 0
    %v866 = vsub.s32 0, %v864
    %v867 = vsel %vm865, %v866, %v864
    %v868 = vclz %v867
    %v869 = vsub.s32 %v868, 2
    %vm870 = vcmp.gt.s32.totalorder 0, %v869
    %v871 = vsel %vm870, 0, %v869
    %v872 = vsub.s32 32, %v871
    %v873 = vshll.u32 %v864, %v871
    %v874 = vshrl.u32 %v856, %v872
    %v875 = vor.u32 %v873, %v874
    %v876 = vsub.s32 4294967266, %v871
    %v877 = vadd.s32 %v876, 127
    %v878 = vshll.u32 %v877, 23
    %v879 = vor.u32 4788187, %v878
    %v880 = vand.u32 2147483647, %v879
    %v882 = vcvt.s32.f32 %v875
    %v883 = vmul.f32 %v882, %v880
    %v884 = vxor.u32 %v883, 2147483648
    %v885 = vsel %vm802, %v884, %v883
    %v886 = vsub.s32 4, %v862
    %v887 = vsel %vm802, %v886, %v862
    %v888 = vsel %vm801, %v75, %v885
    %v889 = vsel %vm801, 0, %v887
    %v890 = vcosq.f32.pop %v888
    %v891 = vsinq.f32.pop %v888
    %vm892 = vweird.f32 %v75
    %v893 = vadd.s32 %v889, 3
    %v894 = vand.u32 %v893, 3
    %vm895 = vcmp.lt.s32.totalorder %v894, 2
    %vm896 = vcmp.eq.s32.totalorder %v894, 0
    %v897 = vxor.u32 %v891, 2147483648
    %v898 = vsel %vm896, %v890, %v897
    %vm899 = vcmp.eq.s32.totalorder %v894, 2
    %v900 = vxor.u32 %v890, 2147483648
    %v901 = vsel %vm899, %v900, %v891
    %v902 = vsel %vm895, %v898, %v901
    %v903 = vsel %vm892, nan, %v902
    %908 = vrot.lane.b32.xlu0 %v178, 64
    %v909 = vpop.permute.xlu0 %908
    %910 = vrot.lane.b32.xlu0 %v281, 64
    %v911 = vpop.permute.xlu0 %910
    %912 = vrot.lane.b32.xlu0 %v384, 64
    %v913 = vpop.permute.xlu0 %912
    %914 = vrot.lane.b32.xlu0 %v487, 64
    %v915 = vpop.permute.xlu0 %914
    %vm920 = vcmask 523264
    %v921 = vsel %vm920, %v178, %v909
    %v922 = vsel %vm920, %v281, %v911
    %v923 = vsel %vm920, %v384, %v913
    %v924 = vsel %vm920, %v487, %v915
    %925 = vst [vmem:[#allocation7] sm:$0xff] %v921
    %926 = vst [vmem:[#allocation7 + $0x8] sm:$0xff] %v922
    %927 = vst [vmem:[#allocation7 + $0x10] sm:$0xff] %v923
    %928 = vst [vmem:[#allocation7 + $0x18] sm:$0xff] %v924
    %933 = vrot.lane.b32.xlu0 %v591, 64
    %v934 = vpop.permute.xlu0 %933
    %935 = vrot.lane.b32.xlu0 %v695, 64
    %v936 = vpop.permute.xlu0 %935
    %937 = vrot.lane.b32.xlu0 %v799, 64
    %v938 = vpop.permute.xlu0 %937
    %939 = vrot.lane.b32.xlu0 %v903, 64
    %v940 = vpop.permute.xlu0 %939
    %v945 = vsel %vm920, %v591, %v934
    %v946 = vsel %vm920, %v695, %v936
    %v947 = vsel %vm920, %v799, %v938
    %v948 = vsel %vm920, %v903, %v940
    %949 = vst [vmem:[#allocation8] sm:$0xff] %v945
    %950 = vst [vmem:[#allocation8 + $0x8] sm:$0xff] %v946
    %951 = vst [vmem:[#allocation8 + $0x10] sm:$0xff] %v947
    %952 = vst [vmem:[#allocation8 + $0x18] sm:$0xff] %v948
    // Predicated region
    $region18: #{tpu_custom_call.1} parent=1 // pred_check
      _
    $region19: #{tpu_custom_call.1} parent=1 // pred_check_branch
      %954 = sbr.rel (0) target = $region21
    $region20: #{tpu_custom_call.1} parent=1 // pred_region
      %s956 = ssub.s32 512, 512
      %957 = vsyncadd [#allocation4], %s956
      %s958 = sshll.u32 [#allocation7], 4
      %s959 = int_to_ptr.vmem [resolvable:$true] %s958
      %964 = dma.vmem_to_hbm [thread:$0]  %s959, 512, %s2, [#allocation4], 128, 128, 8
    $region21: #{tpu_custom_call.1} parent=1 // pred_fallthru
      _
    // Predicated region
    $region22: #{tpu_custom_call.1} parent=1 // pred_check
      _
    $region23: #{tpu_custom_call.1} parent=1 // pred_check_branch
      %966 = sbr.rel (0) target = $region25
    $region24: #{tpu_custom_call.1} parent=1 // pred_region
      %s968 = ssub.s32 512, 512
      %969 = vsyncadd [#allocation9], %s968
      %s970 = sshll.u32 [#allocation8], 4
      %s971 = int_to_ptr.vmem [resolvable:$true] %s970
      %976 = dma.vmem_to_hbm [thread:$0]  %s971, 512, %s3, [#allocation9], 128, 128, 8
    $region25: #{tpu_custom_call.1} parent=1 // pred_fallthru
      _
    // Predicated region
    $region26: #{tpu_custom_call.1} parent=1 // pred_check
      _
    $region27: #{tpu_custom_call.1} parent=1 // pred_check_branch
      %978 = sbr.rel (0) target = $region29
    $region28: #{tpu_custom_call.1} parent=1 // pred_region
      %979 = dma.done [#allocation4], 512
    $region29: #{tpu_custom_call.1} parent=1 // pred_fallthru
      _
    // Predicated region
    $region30: #{tpu_custom_call.1} parent=1 // pred_check
      _
    $region31: #{tpu_custom_call.1} parent=1 // pred_check_branch
      %981 = sbr.rel (0) target = $region33
    $region32: #{tpu_custom_call.1} parent=1 // pred_region
      %982 = dma.done [#allocation9], 512
    $region33: #{tpu_custom_call.1} parent=1 // pred_fallthru
      _
    %983 = vsyncpa [#allocation3], 1
    %984 = vsyncpa [#allocation6], 1
    %985 = vsyncpa [#allocation4], 1
    %986 = vsyncpa [#allocation9], 1

</llo_original>
